<compile_context>
chip_gen: v6e
topology: v6e:2x2x1
jax: 0.10.0
libtpu: 0.0.40
codegen_flags: <defaults>
</compile_context>

<pallas_src>
import math
import numpy as np

import jax
import jax.numpy as jnp
from jax.experimental import pallas as pl
from jax.experimental.pallas import tpu as pltpu

WIN = 11          # pytorch_ssim default window size
SIGMA = 1.5       # pytorch_ssim default sigma
PAD = WIN // 2
C1 = 0.01 ** 2
C2 = 0.03 ** 2


def _gaussian_1d(window_size=WIN, sigma=SIGMA):
    g = np.array(
        [math.exp(-((x - window_size // 2) ** 2) / (2.0 * sigma ** 2))
         for x in range(window_size)],
        dtype=np.float64,
    )
    return (g / g.sum()).astype(np.float32)


def _toeplitz_h(H, g):
    """(H, H): T @ X == 'same' zero-padded Gaussian blur along the row axis."""
    t = np.zeros((H, H), np.float32)
    for h in range(H):
        for k in range(WIN):
            j = h + k - PAD
            if 0 <= j < H:
                t[h, j] = g[k]
    return t


def _toeplitz_wc(W, C, g):
    """(W*C, W*C): Y @ T == zero-padded blur along W when the lane axis is the
    flattened (W, C) axis (channels interleaved with stride C)."""
    t = np.zeros((W * C, W * C), np.float32)
    for wo in range(W):
        for k in range(WIN):
            wi = wo + k - PAD
            if 0 <= wi < W:
                for c in range(C):
                    t[wi * C + c, wo * C + c] = g[k]
    return t


def _make_kernel(H, WC, b):
    b = float(b)

    def kernel(th_ref, twc_ref, p_ref, t_ref, out_ref):
        x1 = p_ref[0]                      # (H, W*C) f32, lane-dense
        x2 = t_ref[0]
        th = th_ref[...]                   # (H, H)
        twc = twc_ref[...]                 # (W*C, W*C)

        # Five blur inputs stacked along sublanes -> one fused MXU W-pass.
        stacked = jnp.concatenate(
            [x1, x2, x1 * x1, x2 * x2, x1 * x2], axis=0)         # (5H, WC)
        sw = jnp.dot(stacked, twc,
                     preferred_element_type=jnp.float32)          # (5H, WC)

        def hpass(k):                       # per-field blur along H (MXU)
            return jnp.dot(th, sw[k * H:(k + 1) * H],
                           preferred_element_type=jnp.float32)    # (H, WC)

        mu1 = hpass(0)
        mu2 = hpass(1)
        sigma1_sq = hpass(2) - mu1 * mu1
        sigma2_sq = hpass(3) - mu2 * mu2
        sigma12 = hpass(4) - mu1 * mu2

        ssim_map = ((2.0 * mu1 * mu2 + C1) * (2.0 * sigma12 + C2)) / (
            (mu1 * mu1 + mu2 * mu2 + C1) * (sigma1_sq + sigma2_sq + C2))

        l1_sum = jnp.sum(jnp.abs(x1 - x2))
        dssim_sum = jnp.sum(1.0 - ssim_map)
        total = (1.0 - b) * l1_sum + b * dssim_sum                # 0-d f32
        out_ref[...] = jnp.broadcast_to(total, (1, 1, 1))

    return kernel


def dssim_l1_loss(pred, gt, b=0.2):
    """Pallas implementation of DssimL1Loss().forward(pred, gt) (NHWC)."""
    assert pred.shape == gt.shape and pred.ndim == 4
    N, H, W, C = pred.shape
    WC = W * C
    g = _gaussian_1d()

    # NHWC -> (N, H, W*C): free row-major reshape, W*C becomes the lane axis.
    p2 = pred.astype(jnp.float32).reshape(N, H, WC)
    t2 = gt.astype(jnp.float32).reshape(N, H, WC)
    t_h = jnp.asarray(_toeplitz_h(H, g))
    t_wc = jnp.asarray(_toeplitz_wc(W, C, g))

    kernel = _make_kernel(H, WC, float(b))

    # TODO(synk): for large images, add a grid axis over H row-tiles with a
    # 2*PAD halo so input blocks + f32 temporaries stay under v7x's VMEM.
    partials = pl.pallas_call(
        kernel,
        out_shape=jax.ShapeDtypeStruct((N, 1, 1), jnp.float32),
        grid_spec=pltpu.PrefetchScalarGridSpec(
            num_scalar_prefetch=0,
            grid=(N,),
            in_specs=[
                pl.BlockSpec((H, H), lambda n: (0, 0)),
                pl.BlockSpec((WC, WC), lambda n: (0, 0)),
                pl.BlockSpec((1, H, WC), lambda n: (n, 0, 0)),
                pl.BlockSpec((1, H, WC), lambda n: (n, 0, 0)),
            ],
            out_specs=pl.BlockSpec((1, 1, 1), lambda n: (n, 0, 0)),
        ),
        compiler_params=pltpu.CompilerParams(
            dimension_semantics=("parallel",)),
    )(t_h, t_wc, p2, t2)

    # Final scalar mean over all elements (glue).
    return jnp.sum(partials) / float(N * H * W * C)


def _reference(pred, gt, b=0.2):
    """Pure-JAX reference (depthwise conv), mirrors pytorch_ssim + the module."""
    g = _gaussian_1d()
    w2d = jnp.asarray(np.outer(g, g), jnp.float32)
    N, H, W, C = pred.shape
    x1 = jnp.transpose(pred.astype(jnp.float32), (0, 3, 1, 2))  # NCHW
    x2 = jnp.transpose(gt.astype(jnp.float32), (0, 3, 1, 2))
    wk = jnp.broadcast_to(w2d, (C, 1, WIN, WIN))

    def conv(x):
        return jax.lax.conv_general_dilated(
            x, wk, (1, 1), [(PAD, PAD), (PAD, PAD)],
            feature_group_count=C,
            dimension_numbers=("NCHW", "OIHW", "NCHW"),
            precision=jax.lax.Precision.HIGHEST)

    mu1, mu2 = conv(x1), conv(x2)
    s1 = conv(x1 * x1) - mu1 * mu1
    s2 = conv(x2 * x2) - mu2 * mu2
    s12 = conv(x1 * x2) - mu1 * mu2
    ssim_map = ((2 * mu1 * mu2 + C1) * (2 * s12 + C2)) / (
        (mu1 * mu1 + mu2 * mu2 + C1) * (s1 + s2 + C2))
    l1 = jnp.abs(x1 - x2)
    return jnp.mean((1.0 - b) * l1 + b * (1.0 - ssim_map))


if __name__ == "__main__":
    key = jax.random.PRNGKey(0)
    k1, k2 = jax.random.split(key)
    N, H, W, C = 2, 16, 16, 4
    pred = jax.random.uniform(k1, (N, H, W, C), dtype=jnp.float32)
    gt = jax.random.uniform(k2, (N, H, W, C), dtype=jnp.float32)

    loss = dssim_l1_loss(pred, gt, b=0.2)
    loss = jax.block_until_ready(loss)

    ref = _reference(pred, gt, b=0.2)
    assert abs(float(loss) - float(ref)) < 2e-3, (float(loss), float(ref))

    print("KERNEL_OK")
</pallas_src>

<mosaic_0001>
module attributes {stable_mosaic.version = 11 : i64} {
  func.func @kernel(%arg0: i32, %arg1: memref<16x16xf32, #tpu.memory_space<vmem>>, %arg2: memref<64x64xf32, #tpu.memory_space<vmem>>, %arg3: memref<1x16x64xf32, #tpu.memory_space<vmem>>, %arg4: memref<1x16x64xf32, #tpu.memory_space<vmem>>, %arg5: memref<1x1x1xf32, #tpu.memory_space<vmem>>) attributes {dimension_semantics = [#tpu.dimension_semantics<parallel>], iteration_bounds = array<i64: 2>, scalar_prefetch = 0 : i64, scratch_operands = 0 : i64, tpu.core_type = #tpu.core_type<tc>, window_params = [{pipeline_mode = #tpu.pipeline_mode<synchronous>, transform_indices = @transform_0, window_bounds = array<i64: 16, 16>}, {pipeline_mode = #tpu.pipeline_mode<synchronous>, transform_indices = @transform_1, window_bounds = array<i64: 64, 64>}, {transform_indices = @transform_2, window_bounds = array<i64: 1, 16, 64>}, {transform_indices = @transform_3, window_bounds = array<i64: 1, 16, 64>}, {transform_indices = @transform_4, window_bounds = array<i64: 1, 1, 1>}]} {
    %c0 = arith.constant 0 : index
    %c0_0 = arith.constant 0 : index
    %c0_1 = arith.constant 0 : index
    %0 = vector.load %arg3[%c0, %c0_0, %c0_1] : memref<1x16x64xf32, #tpu.memory_space<vmem>>, vector<1x16x64xf32>
    %1 = vector.shape_cast %0 : vector<1x16x64xf32> to vector<16x64xf32>
    %c0_2 = arith.constant 0 : index
    %c0_3 = arith.constant 0 : index
    %c0_4 = arith.constant 0 : index
    %2 = vector.load %arg4[%c0_2, %c0_3, %c0_4] : memref<1x16x64xf32, #tpu.memory_space<vmem>>, vector<1x16x64xf32>
    %3 = vector.shape_cast %2 : vector<1x16x64xf32> to vector<16x64xf32>
    %c0_5 = arith.constant 0 : index
    %c0_6 = arith.constant 0 : index
    %4 = vector.load %arg1[%c0_5, %c0_6] : memref<16x16xf32, #tpu.memory_space<vmem>>, vector<16x16xf32>
    %c0_7 = arith.constant 0 : index
    %c0_8 = arith.constant 0 : index
    %5 = vector.load %arg2[%c0_7, %c0_8] : memref<64x64xf32, #tpu.memory_space<vmem>>, vector<64x64xf32>
    %6 = arith.mulf %1, %1 : vector<16x64xf32>
    %7 = arith.mulf %3, %3 : vector<16x64xf32>
    %8 = arith.mulf %1, %3 : vector<16x64xf32>
    %9 = tpu.concatenate %1, %3, %6, %7, %8 in 0 : vector<16x64xf32>, vector<16x64xf32>, vector<16x64xf32>, vector<16x64xf32>, vector<16x64xf32> -> vector<80x64xf32>
    %cst = arith.constant dense<0.000000e+00> : vector<80x64xf32>
    %10 = tpu.matmul %9, %5, %cst {dimension_numbers = #tpu.dot_dimension_numbers<[1], [0], [0], [1], [0, 0, 1, 1], [], []>} : vector<80x64xf32>, vector<64x64xf32>, vector<80x64xf32> -> vector<80x64xf32>
    %11 = vector.extract_strided_slice %10 {offsets = [0, 0], sizes = [16, 64], strides = [1, 1]} : vector<80x64xf32> to vector<16x64xf32>
    %cst_9 = arith.constant dense<0.000000e+00> : vector<16x64xf32>
    %12 = tpu.matmul %4, %11, %cst_9 {dimension_numbers = #tpu.dot_dimension_numbers<[1], [0], [0], [1], [0, 0, 1, 1], [], []>} : vector<16x16xf32>, vector<16x64xf32>, vector<16x64xf32> -> vector<16x64xf32>
    %13 = vector.extract_strided_slice %10 {offsets = [16, 0], sizes = [16, 64], strides = [1, 1]} : vector<80x64xf32> to vector<16x64xf32>
    %cst_10 = arith.constant dense<0.000000e+00> : vector<16x64xf32>
    %14 = tpu.matmul %4, %13, %cst_10 {dimension_numbers = #tpu.dot_dimension_numbers<[1], [0], [0], [1], [0, 0, 1, 1], [], []>} : vector<16x16xf32>, vector<16x64xf32>, vector<16x64xf32> -> vector<16x64xf32>
    %15 = vector.extract_strided_slice %10 {offsets = [32, 0], sizes = [16, 64], strides = [1, 1]} : vector<80x64xf32> to vector<16x64xf32>
    %cst_11 = arith.constant dense<0.000000e+00> : vector<16x64xf32>
    %16 = tpu.matmul %4, %15, %cst_11 {dimension_numbers = #tpu.dot_dimension_numbers<[1], [0], [0], [1], [0, 0, 1, 1], [], []>} : vector<16x16xf32>, vector<16x64xf32>, vector<16x64xf32> -> vector<16x64xf32>
    %17 = arith.mulf %12, %12 : vector<16x64xf32>
    %18 = arith.subf %16, %17 : vector<16x64xf32>
    %19 = vector.extract_strided_slice %10 {offsets = [48, 0], sizes = [16, 64], strides = [1, 1]} : vector<80x64xf32> to vector<16x64xf32>
    %cst_12 = arith.constant dense<0.000000e+00> : vector<16x64xf32>
    %20 = tpu.matmul %4, %19, %cst_12 {dimension_numbers = #tpu.dot_dimension_numbers<[1], [0], [0], [1], [0, 0, 1, 1], [], []>} : vector<16x16xf32>, vector<16x64xf32>, vector<16x64xf32> -> vector<16x64xf32>
    %21 = arith.mulf %14, %14 : vector<16x64xf32>
    %22 = arith.subf %20, %21 : vector<16x64xf32>
    %23 = vector.extract_strided_slice %10 {offsets = [64, 0], sizes = [16, 64], strides = [1, 1]} : vector<80x64xf32> to vector<16x64xf32>
    %cst_13 = arith.constant dense<0.000000e+00> : vector<16x64xf32>
    %24 = tpu.matmul %4, %23, %cst_13 {dimension_numbers = #tpu.dot_dimension_numbers<[1], [0], [0], [1], [0, 0, 1, 1], [], []>} : vector<16x16xf32>, vector<16x64xf32>, vector<16x64xf32> -> vector<16x64xf32>
    %25 = arith.mulf %12, %14 : vector<16x64xf32>
    %26 = arith.subf %24, %25 : vector<16x64xf32>
    %cst_14 = arith.constant 2.000000e+00 : f32
    %27 = vector.broadcast %cst_14 : f32 to vector<16x64xf32>
    %28 = arith.mulf %27, %12 : vector<16x64xf32>
    %29 = arith.mulf %28, %14 : vector<16x64xf32>
    %cst_15 = arith.constant 9.99999974E-5 : f32
    %30 = vector.broadcast %cst_15 : f32 to vector<16x64xf32>
    %31 = arith.addf %29, %30 : vector<16x64xf32>
    %cst_16 = arith.constant 2.000000e+00 : f32
    %32 = vector.broadcast %cst_16 : f32 to vector<16x64xf32>
    %33 = arith.mulf %32, %26 : vector<16x64xf32>
    %cst_17 = arith.constant 8.99999984E-4 : f32
    %34 = vector.broadcast %cst_17 : f32 to vector<16x64xf32>
    %35 = arith.addf %33, %34 : vector<16x64xf32>
    %36 = arith.mulf %31, %35 : vector<16x64xf32>
    %37 = arith.mulf %12, %12 : vector<16x64xf32>
    %38 = arith.mulf %14, %14 : vector<16x64xf32>
    %39 = arith.addf %37, %38 : vector<16x64xf32>
    %cst_18 = arith.constant 9.99999974E-5 : f32
    %40 = vector.broadcast %cst_18 : f32 to vector<16x64xf32>
    %41 = arith.addf %39, %40 : vector<16x64xf32>
    %42 = arith.addf %18, %22 : vector<16x64xf32>
    %cst_19 = arith.constant 8.99999984E-4 : f32
    %43 = vector.broadcast %cst_19 : f32 to vector<16x64xf32>
    %44 = arith.addf %42, %43 : vector<16x64xf32>
    %45 = arith.mulf %41, %44 : vector<16x64xf32>
    %46 = arith.divf %36, %45 : vector<16x64xf32>
    %47 = arith.subf %1, %3 : vector<16x64xf32>
    %48 = math.absf %47 : vector<16x64xf32>
    %49 = vector.shape_cast %48 : vector<16x64xf32> to vector<1x16x64xf32>
    %cst_20 = arith.constant dense<0.000000e+00> : vector<1xf32>
    %50 = vector.multi_reduction <add>, %49, %cst_20 [1, 2] : vector<1x16x64xf32> to vector<1xf32>
    %51 = vector.shape_cast %50 : vector<1xf32> to vector<1x1x1xf32>
    %52 = vector.extract %51[0, 0, 0] : f32 from vector<1x1x1xf32>
    %cst_21 = arith.constant 1.000000e+00 : f32
    %53 = vector.broadcast %cst_21 : f32 to vector<16x64xf32>
    %54 = arith.subf %53, %46 : vector<16x64xf32>
    %55 = vector.shape_cast %54 : vector<16x64xf32> to vector<1x16x64xf32>
    %cst_22 = arith.constant dense<0.000000e+00> : vector<1xf32>
    %56 = vector.multi_reduction <add>, %55, %cst_22 [1, 2] : vector<1x16x64xf32> to vector<1xf32>
    %57 = vector.shape_cast %56 : vector<1xf32> to vector<1x1x1xf32>
    %58 = vector.extract %57[0, 0, 0] : f32 from vector<1x1x1xf32>
    %cst_23 = arith.constant 8.000000e-01 : f32
    %59 = arith.mulf %cst_23, %52 : f32
    %cst_24 = arith.constant 2.000000e-01 : f32
    %60 = arith.mulf %cst_24, %58 : f32
    %61 = arith.addf %59, %60 : f32
    %62 = vector.broadcast %61 : f32 to vector<1x1x1xf32>
    %c0_25 = arith.constant 0 : index
    %c0_26 = arith.constant 0 : index
    %c0_27 = arith.constant 0 : index
    %63 = vector.load %arg5[%c0_25, %c0_26, %c0_27] : memref<1x1x1xf32, #tpu.memory_space<vmem>>, vector<1x1x1xf32>
    tpu.vector_store %arg5[%c0_25, %c0_26, %c0_27], %62 {strides = array<i32>} : memref<1x1x1xf32, #tpu.memory_space<vmem>>, vector<1x1x1xf32>,
    return
  }
  func.func @transform_0(%arg0: i32) -> (i32, i32) {
    %c0_i32 = arith.constant 0 : i32
    %c0_i32_0 = arith.constant 0 : i32
    %c0_i32_1 = arith.constant 0 : i32
    return %c0_i32, %c0_i32_0 : i32, i32
  }
  func.func @transform_1(%arg0: i32) -> (i32, i32) {
    %c0_i32 = arith.constant 0 : i32
    %c0_i32_0 = arith.constant 0 : i32
    %c0_i32_1 = arith.constant 0 : i32
    return %c0_i32, %c0_i32_0 : i32, i32
  }
  func.func @transform_2(%arg0: i32) -> (i32, i32, i32) {
    %c0_i32 = arith.constant 0 : i32
    %c0_i32_0 = arith.constant 0 : i32
    %c0_i32_1 = arith.constant 0 : i32
    return %arg0, %c0_i32, %c0_i32_0 : i32, i32, i32
  }
  func.func @transform_3(%arg0: i32) -> (i32, i32, i32) {
    %c0_i32 = arith.constant 0 : i32
    %c0_i32_0 = arith.constant 0 : i32
    %c0_i32_1 = arith.constant 0 : i32
    return %arg0, %c0_i32, %c0_i32_0 : i32, i32, i32
  }
  func.func @transform_4(%arg0: i32) -> (i32, i32, i32) {
    %c0_i32 = arith.constant 0 : i32
    %c0_i32_0 = arith.constant 0 : i32
    %c0_i32_1 = arith.constant 0 : i32
    return %arg0, %c0_i32, %c0_i32_0 : i32, i32, i32
  }
}

</mosaic_0001>

<llo_original>
// kernel: tpu_custom_call.1
$region0: #{tpu_custom_call.1}
  #allocation0 [shape = 'u32[]', space=smem, size = 0x4, offset = 0x4, fixed_abs, tag = 'smem constant byte address 0x4 - core index']
  #allocation1 [shape = 'u32[144,128]{1,0:T(1,128)}', space=vmem, size = 0x12000, scoped, tag = 'internal scratch']
  %s0 = inlined_call_operand.hbm [shape: f32[16,16], index: 0, kind: input, shape index: {}]
  %s1 = inlined_call_operand.hbm [shape: f32[64,64], index: 1, kind: input, shape index: {}]
  %s2 = inlined_call_operand.hbm [shape: f32[2,16,64], index: 2, kind: input, shape index: {}]
  %s3 = inlined_call_operand.hbm [shape: f32[2,16,64], index: 3, kind: input, shape index: {}]
  %s4 = inlined_call_operand.vmem [shape: f32[2,1,1], index: 4, kind: output, shape index: {}]
  %s5 = sld [smem:[#allocation0]]
  $region65: #{tpu_custom_call.1} parent=0
    _
  %s7 = ssub.s32 1, %s5
  %s8 = scalar_select 0, %s7, %s5
  $region1: #{tpu_custom_call.1} parent=0
    #allocation2 [shape = 'u8[8192]{0}', space=vmem, size = 0x2000, scoped, tag = 'input window, operand 0, single buffered']
    #allocation3 [shape = 's32[2]{0}', space=sflag, size = 0x8, scoped, tag = 'scoped memory for tpu_custom_call.1']
    #allocation4 [shape = 'u8[32768]{0}', space=vmem, size = 0x8000, scoped, tag = 'input window, operand 1, single buffered']
    #allocation5 [shape = 's32[1]{0}', space=sflag, size = 0x4, scoped, tag = 'scoped memory for tpu_custom_call.1']
    #allocation6 [shape = 'u8[16384]{0}', space=vmem, size = 0x4000, scoped, tag = 'input window, operand 2']
    #allocation7 [shape = 'u8[16384]{0}', space=vmem, size = 0x4000, scoped, tag = 'input window, operand 3']
    %9 = vsyncpa [#allocation3], 0
    %10 = vsyncpa [#allocation5], 0
    loop: start=0, step=1, limit=4
    $region2: #{tpu_custom_call.1} parent=1 // loop_pre_header
      _
    $region3: #{tpu_custom_call.1} parent=1 // loop_header
      %s12 = sphi 0, %s16
      %p13 = scmp.ge.s32.totalorder %s12, 4
      %s20 = sphi 0, %s20
      %s22 = sphi 0, %s20
      %s23 = sphi 0, %s22
      %s37 = sphi 0, %s23
      %s41 = sphi 0, %s41
      %s43 = sphi 0, %s41
      %s44 = sphi 0, %s43
      %s58 = sphi 0, %s44
      %s64 = sphi 0, %s66
      %s67 = sphi 0, %s64
      %s68 = sphi 0, %s67
      %s84 = sphi 0, %s68
      %s90 = sphi 0, %s92
      %s93 = sphi 0, %s90
      %s94 = sphi 0, %s93
      %s110 = sphi 0, %s94
      %s116 = sphi 0, %s118
      %s119 = sphi 0, %s116
      %s120 = sphi 0, %s119
      %s136 = sphi 0, %s120
    $region4: #{tpu_custom_call.1} parent=1 // loop_header_branch
      %15 = sbr.rel (%p13) target = $region8
    $region5: #{tpu_custom_call.1} parent=1 // loop_body
      %s17 = ssub.s32 %s12, 1
      %s18 = ssub.s32 %s12, 2
      %s19 = sadd.s32 %s12, 1
      %s21 = sadd.s32 %s20, 1
      %p24 = scmp.eq.s32.totalorder %s12, 1
      %p25 = scmp.ne.s32.totalorder %s20, %s22
      %p26 = scmp.eq.s32.totalorder %s12, 0
      %p27 = por %p25, %p26
      %p28 = scmp.ne.s32.totalorder %s20, %s22
      %p29 = scmp.eq.s32.totalorder %s17, 1
      %p30 = por %p28, %p29
      %p31 = scmp.ne.s32.totalorder %s22, %s23
      %p32 = scmp.eq.s32.totalorder %s17, 0
      %p33 = por %p31, %p32
      %p34 = scmp.ne.s32.totalorder %s22, %s23
      %p35 = scmp.eq.s32.totalorder %s18, 1
      %p36 = por %p34, %p35
      %p38 = scmp.ne.s32.totalorder %s23, %s37
      %p39 = scmp.eq.s32.totalorder %s18, 0
      %p40 = por %p38, %p39
      %s42 = sadd.s32 %s41, 1
      %p45 = scmp.eq.s32.totalorder %s12, 1
      %p46 = scmp.ne.s32.totalorder %s41, %s43
      %p47 = scmp.eq.s32.totalorder %s12, 0
      %p48 = por %p46, %p47
      %p49 = scmp.ne.s32.totalorder %s41, %s43
      %p50 = scmp.eq.s32.totalorder %s17, 1
      %p51 = por %p49, %p50
      %p52 = scmp.ne.s32.totalorder %s43, %s44
      %p53 = scmp.eq.s32.totalorder %s17, 0
      %p54 = por %p52, %p53
      %p55 = scmp.ne.s32.totalorder %s43, %s44
      %p56 = scmp.eq.s32.totalorder %s18, 1
      %p57 = por %p55, %p56
      %p59 = scmp.ne.s32.totalorder %s44, %s58
      %p60 = scmp.eq.s32.totalorder %s18, 0
      %p61 = por %p59, %p60
      %s62 = ssub.s32 %s12, %s19
      %p63 = scmp.eq.s32.totalorder %s62, 0
      %s65 = sadd.s32 %s64, 1
      %s66 = scalar_select %p63, %s64, %s65
      %p69 = pneg %p63
      %p70 = scmp.eq.s32.totalorder %s12, 1
      %p71 = por %p69, %p70
      %p72 = scmp.ne.s32.totalorder %s64, %s67
      %p73 = scmp.eq.s32.totalorder %s12, 0
      %p74 = por %p72, %p73
      %p75 = scmp.ne.s32.totalorder %s64, %s67
      %p76 = scmp.eq.s32.totalorder %s17, 1
      %p77 = por %p75, %p76
      %p78 = scmp.ne.s32.totalorder %s67, %s68
      %p79 = scmp.eq.s32.totalorder %s17, 0
      %p80 = por %p78, %p79
      %p81 = scmp.ne.s32.totalorder %s67, %s68
      %p82 = scmp.eq.s32.totalorder %s18, 1
      %p83 = por %p81, %p82
      %p85 = scmp.ne.s32.totalorder %s68, %s84
      %p86 = scmp.eq.s32.totalorder %s18, 0
      %p87 = por %p85, %p86
      %s88 = ssub.s32 %s12, %s19
      %p89 = scmp.eq.s32.totalorder %s88, 0
      %s91 = sadd.s32 %s90, 1
      %s92 = scalar_select %p89, %s90, %s91
      %p95 = pneg %p89
      %p96 = scmp.eq.s32.totalorder %s12, 1
      %p97 = por %p95, %p96
      %p98 = scmp.ne.s32.totalorder %s90, %s93
      %p99 = scmp.eq.s32.totalorder %s12, 0
      %p100 = por %p98, %p99
      %p101 = scmp.ne.s32.totalorder %s90, %s93
      %p102 = scmp.eq.s32.totalorder %s17, 1
      %p103 = por %p101, %p102
      %p104 = scmp.ne.s32.totalorder %s93, %s94
      %p105 = scmp.eq.s32.totalorder %s17, 0
      %p106 = por %p104, %p105
      %p107 = scmp.ne.s32.totalorder %s93, %s94
      %p108 = scmp.eq.s32.totalorder %s18, 1
      %p109 = por %p107, %p108
      %p111 = scmp.ne.s32.totalorder %s94, %s110
      %p112 = scmp.eq.s32.totalorder %s18, 0
      %p113 = por %p111, %p112
      %s114 = ssub.s32 %s12, %s19
      %p115 = scmp.eq.s32.totalorder %s114, 0
      %s117 = sadd.s32 %s116, 1
      %s118 = scalar_select %p115, %s116, %s117
      %p121 = pneg %p115
      %p122 = scmp.eq.s32.totalorder %s12, 1
      %p123 = por %p121, %p122
      %p124 = scmp.ne.s32.totalorder %s116, %s119
      %p125 = scmp.eq.s32.totalorder %s12, 0
      %p126 = por %p124, %p125
      %p127 = scmp.ne.s32.totalorder %s116, %s119
      %p128 = scmp.eq.s32.totalorder %s17, 1
      %p129 = por %p127, %p128
      %p130 = scmp.ne.s32.totalorder %s119, %s120
      %p131 = scmp.eq.s32.totalorder %s17, 0
      %p132 = por %p130, %p131
      %p133 = scmp.ne.s32.totalorder %s119, %s120
      %p134 = scmp.eq.s32.totalorder %s18, 1
      %p135 = por %p133, %p134
      %p137 = scmp.ne.s32.totalorder %s120, %s136
      %p138 = scmp.eq.s32.totalorder %s18, 0
      %p139 = por %p137, %p138
      %p140 = scmp.le.s32.totalorder 1, %s12
      %p141 = scmp.lt.s32.totalorder %s12, 3
      %p142 = pnand %p140, %p141
      %p143 = pneg %p142
      // Predicated region
      $region9: #{tpu_custom_call.1} parent=5 // pred_check
        _
      $region10: #{tpu_custom_call.1} parent=5 // pred_check_branch
        %145 = sbr.rel (%p142) target = $region12
      $region11: #{tpu_custom_call.1} parent=5 // pred_region
        %s146 = ssub.s32 %s12, 1
        // Predicated region
        $region13: #{tpu_custom_call.1} parent=11 // pred_check
          %p147 = pneg %p33
        $region14: #{tpu_custom_call.1} parent=11 // pred_check_branch
          %149 = sbr.rel (%p147) target = $region16
        $region15: #{tpu_custom_call.1} parent=11 // pred_region
          %s151 = ssub.s32 256, 256
          %152 = vsyncadd [#allocation3], %s151
          %s153 = sshll.u32 [#allocation2], 4
          %s154 = int_to_ptr.vmem [resolvable:$true] %s153
          %159 = dma.hbm_to_vmem [thread:$0]  %s0, 256, %s154, [#allocation3], 128, 128, 8
        $region16: #{tpu_custom_call.1} parent=11 // pred_fallthru
          _
        // Predicated region
        $region17: #{tpu_custom_call.1} parent=11 // pred_check
          %p160 = pneg %p54
        $region18: #{tpu_custom_call.1} parent=11 // pred_check_branch
          %162 = sbr.rel (%p160) target = $region20
        $region19: #{tpu_custom_call.1} parent=11 // pred_region
          %s164 = ssub.s32 1024, 1024
          %165 = vsyncadd [#allocation5], %s164
          %s166 = sshll.u32 [#allocation4], 4
          %s167 = int_to_ptr.vmem [resolvable:$true] %s166
          %172 = dma.hbm_to_vmem [thread:$0]  %s1, 1024, %s167, [#allocation5], 128, 128, 8
        $region20: #{tpu_custom_call.1} parent=11 // pred_fallthru
          _
      $region12: #{tpu_custom_call.1} parent=5 // pred_fallthru
        _
      %p173 = scmp.lt.s32.totalorder %s12, 2
      // Predicated region
      $region21: #{tpu_custom_call.1} parent=5 // pred_check
        %p174 = pneg %p173
      $region22: #{tpu_custom_call.1} parent=5 // pred_check_branch
        %176 = sbr.rel (%p174) target = $region24
      $region23: #{tpu_custom_call.1} parent=5 // pred_region
        // Predicated region
        $region25: #{tpu_custom_call.1} parent=23 // pred_check
          %p177 = pneg %p74
        $region26: #{tpu_custom_call.1} parent=23 // pred_check_branch
          %179 = sbr.rel (%p177) target = $region28
        $region27: #{tpu_custom_call.1} parent=23 // pred_region
          %s180 = sand.u32 %s12, 1
          %s181 = scalar_lea.sflag [#allocation3], %s180
          %s182 = sand.u32 %s64, 1
          %s183 = smul.addr %s182, 16
          %s184 = scalar_lea.vmem [#allocation6], %s183
          %s186 = ssub.s32 256, 256
          %187 = vsyncadd %s181, %s186
          %s188 = smul.addr %s12, 2
          %s189 = smul.addr %s188, 128
          %s190 = scalar_lea.hbm %s2, %s189
          %s191 = sshll.u32 %s184, 4
          %s192 = int_to_ptr.vmem [resolvable:$true] %s191
          %197 = dma.hbm_to_vmem [thread:$0]  %s190, 256, %s192, %s181, 128, 128, 8
        $region28: #{tpu_custom_call.1} parent=23 // pred_fallthru
          _
        // Predicated region
        $region29: #{tpu_custom_call.1} parent=23 // pred_check
          %p198 = pneg %p100
        $region30: #{tpu_custom_call.1} parent=23 // pred_check_branch
          %200 = sbr.rel (%p198) target = $region32
        $region31: #{tpu_custom_call.1} parent=23 // pred_region
          %s201 = sand.u32 %s12, 1
          %s202 = scalar_lea.sflag [#allocation3], %s201
          %s203 = sand.u32 %s90, 1
          %s204 = smul.addr %s203, 16
          %s205 = scalar_lea.vmem [#allocation7], %s204
          %s207 = ssub.s32 256, 256
          %208 = vsyncadd %s202, %s207
          %s209 = smul.addr %s12, 2
          %s210 = smul.addr %s209, 128
          %s211 = scalar_lea.hbm %s3, %s210
          %s212 = sshll.u32 %s205, 4
          %s213 = int_to_ptr.vmem [resolvable:$true] %s212
          %218 = dma.hbm_to_vmem [thread:$0]  %s211, 256, %s213, %s202, 128, 128, 8
        $region32: #{tpu_custom_call.1} parent=23 // pred_fallthru
          _
      $region24: #{tpu_custom_call.1} parent=5 // pred_fallthru
        _
      %p219 = scmp.le.s32.totalorder 1, %s12
      %p220 = scmp.lt.s32.totalorder %s12, 3
      %p221 = pnand %p219, %p220
      %p222 = pneg %p221
      // Predicated region
      $region33: #{tpu_custom_call.1} parent=5 // pred_check
        _
      $region34: #{tpu_custom_call.1} parent=5 // pred_check_branch
        %224 = sbr.rel (%p221) target = $region36
      $region35: #{tpu_custom_call.1} parent=5 // pred_region
        %s225 = ssub.s32 %s12, 1
        // Predicated region
        $region37: #{tpu_custom_call.1} parent=35 // pred_check
          %p226 = pneg %p33
        $region38: #{tpu_custom_call.1} parent=35 // pred_check_branch
          %228 = sbr.rel (%p226) target = $region40
        $region39: #{tpu_custom_call.1} parent=35 // pred_region
          %229 = dma.done [#allocation3], 256
        $region40: #{tpu_custom_call.1} parent=35 // pred_fallthru
          _
        // Predicated region
        $region41: #{tpu_custom_call.1} parent=35 // pred_check
          %p230 = pneg %p54
        $region42: #{tpu_custom_call.1} parent=35 // pred_check_branch
          %232 = sbr.rel (%p230) target = $region44
        $region43: #{tpu_custom_call.1} parent=35 // pred_region
          %233 = dma.done [#allocation5], 1024
        $region44: #{tpu_custom_call.1} parent=35 // pred_fallthru
          _
        %s234 = sand.u32 %s17, 1
        %s235 = scalar_lea.sflag [#allocation3], %s234
        %s236 = sand.u32 %s67, 1
        %s237 = smul.addr %s236, 16
        %s238 = scalar_lea.vmem [#allocation6], %s237
        // Predicated region
        $region45: #{tpu_custom_call.1} parent=35 // pred_check
          %p239 = pneg %p80
        $region46: #{tpu_custom_call.1} parent=35 // pred_check_branch
          %241 = sbr.rel (%p239) target = $region48
        $region47: #{tpu_custom_call.1} parent=35 // pred_region
          %242 = dma.done %s235, 256
        $region48: #{tpu_custom_call.1} parent=35 // pred_fallthru
          _
        %s243 = sand.u32 %s17, 1
        %s244 = scalar_lea.sflag [#allocation3], %s243
        %s245 = sand.u32 %s93, 1
        %s246 = smul.addr %s245, 16
        %s247 = scalar_lea.vmem [#allocation7], %s246
        // Predicated region
        $region49: #{tpu_custom_call.1} parent=35 // pred_check
          %p248 = pneg %p106
        $region50: #{tpu_custom_call.1} parent=35 // pred_check_branch
          %250 = sbr.rel (%p248) target = $region52
        $region51: #{tpu_custom_call.1} parent=35 // pred_region
          %251 = dma.done %s244, 256
        $region52: #{tpu_custom_call.1} parent=35 // pred_fallthru
          _
        %p252 = pneg %p33
        %p253 = pneg %p30
        %p254 = pneg %p54
        %p255 = pneg %p51
        %s256 = sand.u32 %s17, 1
        %s257 = scalar_lea.sflag [#allocation3], %s256
        %s258 = sand.u32 %s67, 1
        %s259 = smul.addr %s258, 16
        %s260 = scalar_lea.vmem [#allocation6], %s259
        %p261 = pneg %p80
        %p262 = pneg %p77
        %s263 = sand.u32 %s17, 1
        %s264 = scalar_lea.sflag [#allocation3], %s263
        %s265 = sand.u32 %s93, 1
        %s266 = smul.addr %s265, 16
        %s267 = scalar_lea.vmem [#allocation7], %s266
        %p268 = pneg %p106
        %p269 = pneg %p103
        %p270 = pneg %p132
        %p271 = pneg %p129
        %p272 = scmp.lt.s32.totalorder %s17, 1
        %s273 = scalar_select %p272, %s17, 1
        %s274 = scalar_lea.vmem %s4, %s273
        %p275 = scmp.lt.s32.totalorder %s17, 1
        %s276 = scalar_select %p275, %s17, 1
        %s277 = scalar_lea.vmem %s4, %s276
        %v278 = vld [vmem:[%s238] sm:$0xff]
        %v279 = vld [vmem:[%s238 + $0x8] sm:$0xff]
        %v280 = vld [vmem:[%s247] sm:$0xff]
        %v281 = vld [vmem:[%s247 + $0x8] sm:$0xff]
        %v282 = vld [vmem:[#allocation2] sm:$0xff]
        %v283 = vld [vmem:[#allocation2 + $0x8] sm:$0xff]
        %v284 = vld [vmem:[#allocation4] sm:$0xff]
        %v285 = vld [vmem:[#allocation4 + $0x8] sm:$0xff]
        %v286 = vld [vmem:[#allocation4 + $0x10] sm:$0xff]
        %v287 = vld [vmem:[#allocation4 + $0x18] sm:$0xff]
        %v288 = vld [vmem:[#allocation4 + $0x20] sm:$0xff]
        %v289 = vld [vmem:[#allocation4 + $0x28] sm:$0xff]
        %v290 = vld [vmem:[#allocation4 + $0x30] sm:$0xff]
        %v291 = vld [vmem:[#allocation4 + $0x38] sm:$0xff]
        %v292 = vmul.f32 %v278, %v278
        %v293 = vmul.f32 %v279, %v279
        %v294 = vmul.f32 %v280, %v280
        %v295 = vmul.f32 %v281, %v281
        %v296 = vmul.f32 %v278, %v280
        %v297 = vmul.f32 %v279, %v281
        %vm298 = vcmask 523264
        %v300 = vsel %vm298, %v278, 0
        %v303 = vsel %vm298, %v279, 0
        %v306 = vsel %vm298, %v280, 0
        %v309 = vsel %vm298, %v281, 0
        %v312 = vsel %vm298, %v292, 0
        %v315 = vsel %vm298, %v293, 0
        %v318 = vsel %vm298, %v294, 0
        %v321 = vsel %vm298, %v295, 0
        %v324 = vsel %vm298, %v296, 0
        %v327 = vsel %vm298, %v297, 0
        %329 = vmatprep.subr.mxu0 0.0
        %330 = vmatpush1.msra.mxu0 0.0
        %331 = vmatprep.subr.mxu0 0.0
        %332 = vmatpush1.msra.mxu0 0.0
        %333 = vmatprep.subr.mxu0 0.0
        %334 = vmatpush1.msra.mxu0 0.0
        %335 = vmatprep.subr.mxu0 0.0
        %336 = vmatpush1.msra.mxu0 0.0
        %337 = vmatprep.subr.mxu0 0.0
        %338 = vmatpush1.msra.mxu0 0.0
        %339 = vmatprep.subr.mxu0 0.0
        %340 = vmatpush1.msra.mxu0 0.0
        %341 = vmatprep.subr.mxu0 0.0
        %342 = vmatpush1.msra.mxu0 0.0
        %343 = vmatprep.subr.mxu0 0.0
        %344 = vmatpush1.msra.mxu0 0.0
        %345 = vmatprep.subr.mxu0 0.0
        %346 = vmatpush1.msra.mxu0 %v291
        %347 = vmatprep.subr.mxu0 0.0
        %348 = vmatpush1.msra.mxu0 %v290
        %349 = vmatprep.subr.mxu0 0.0
        %350 = vmatpush1.msra.mxu0 %v289
        %351 = vmatprep.subr.mxu0 0.0
        %352 = vmatpush1.msra.mxu0 %v288
        %353 = vmatprep.subr.mxu0 0.0
        %354 = vmatpush1.msra.mxu0 %v287
        %355 = vmatprep.subr.mxu0 0.0
        %356 = vmatpush1.msra.mxu0 %v286
        %357 = vmatprep.subr.mxu0 0.0
        %358 = vmatpush1.msra.mxu0 %v285
        %359 = vmatprep.subr.mxu0 0.0
        %360 = vmatpush1.msra.mxu0 %v284
        %361 = vmatprep.subr.mxu0 0.0
        %362 = vmatpush2.msra.mxu0 0.0
        %363 = vmatprep.subr.mxu0 0.0
        %364 = vmatpush2.msra.mxu0 0.0
        %365 = vmatprep.subr.mxu0 0.0
        %366 = vmatpush2.msra.mxu0 0.0
        %367 = vmatprep.subr.mxu0 0.0
        %368 = vmatpush2.msra.mxu0 0.0
        %369 = vmatprep.subr.mxu0 0.0
        %370 = vmatpush2.msra.mxu0 0.0
        %371 = vmatprep.subr.mxu0 0.0
        %372 = vmatpush2.msra.mxu0 0.0
        %373 = vmatprep.subr.mxu0 0.0
        %374 = vmatpush2.msra.mxu0 0.0
        %375 = vmatprep.subr.mxu0 0.0
        %376 = vmatpush2.msra.mxu0 0.0
        %377 = vmatprep.subr.mxu0 0.0
        %378 = vmatpush2.msra.mxu0 0.0
        %379 = vmatprep.subr.mxu0 0.0
        %380 = vmatpush2.msra.mxu0 0.0
        %381 = vmatprep.subr.mxu0 0.0
        %382 = vmatpush2.msra.mxu0 0.0
        %383 = vmatprep.subr.mxu0 0.0
        %384 = vmatpush2.msra.mxu0 0.0
        %385 = vmatprep.subr.mxu0 0.0
        %386 = vmatpush2.msra.mxu0 0.0
        %387 = vmatprep.subr.mxu0 0.0
        %388 = vmatpush2.msra.mxu0 0.0
        %389 = vmatprep.subr.mxu0 0.0
        %390 = vmatpush2.msra.mxu0 0.0
        %391 = vmatprep.subr.mxu0 0.0
        %392 = vmatpush2.msra.mxu0 0.0
        %393 = vmatprep.mubr.f32.mxu0 0.0
        %394 = vmatmul.mubr.f32.gmra.mxu0 %v300
        %v395 = vpop.f32.mrf.mxu0
        %v396 = vadd.f32 0.0, %v395
        %v397 = vpop.f32.mrf.mxu0
        %398 = vmatprep.mubr.f32.mxu0 0.0
        %399 = vmatmul.mubr.f32.gmra.mxu0 %v303
        %v400 = vpop.f32.mrf.mxu0
        %v401 = vadd.f32 0.0, %v400
        %v402 = vpop.f32.mrf.mxu0
        %403 = vmatprep.mubr.f32.mxu0 0.0
        %404 = vmatmul.mubr.f32.gmra.mxu0 %v306
        %v405 = vpop.f32.mrf.mxu0
        %v406 = vadd.f32 0.0, %v405
        %v407 = vpop.f32.mrf.mxu0
        %408 = vmatprep.mubr.f32.mxu0 0.0
        %409 = vmatmul.mubr.f32.gmra.mxu0 %v309
        %v410 = vpop.f32.mrf.mxu0
        %v411 = vadd.f32 0.0, %v410
        %v412 = vpop.f32.mrf.mxu0
        %413 = vmatprep.mubr.f32.mxu0 0.0
        %414 = vmatmul.mubr.f32.gmra.mxu0 %v312
        %v415 = vpop.f32.mrf.mxu0
        %v416 = vadd.f32 0.0, %v415
        %v417 = vpop.f32.mrf.mxu0
        %418 = vmatprep.mubr.f32.mxu0 0.0
        %419 = vmatmul.mubr.f32.gmra.mxu0 %v315
        %v420 = vpop.f32.mrf.mxu0
        %v421 = vadd.f32 0.0, %v420
        %v422 = vpop.f32.mrf.mxu0
        %423 = vmatprep.mubr.f32.mxu0 0.0
        %424 = vmatmul.mubr.f32.gmra.mxu0 %v318
        %v425 = vpop.f32.mrf.mxu0
        %v426 = vadd.f32 0.0, %v425
        %v427 = vpop.f32.mrf.mxu0
        %428 = vmatprep.mubr.f32.mxu0 0.0
        %429 = vmatmul.mubr.f32.gmra.mxu0 %v321
        %v430 = vpop.f32.mrf.mxu0
        %v431 = vadd.f32 0.0, %v430
        %v432 = vpop.f32.mrf.mxu0
        %433 = vmatprep.mubr.f32.mxu0 0.0
        %434 = vmatmul.mubr.f32.gmra.mxu0 %v324
        %v435 = vpop.f32.mrf.mxu0
        %v436 = vadd.f32 0.0, %v435
        %v437 = vpop.f32.mrf.mxu0
        %438 = vmatprep.mubr.f32.mxu0 0.0
        %439 = vmatmul.mubr.f32.gmra.mxu0 %v327
        %v440 = vpop.f32.mrf.mxu0
        %v441 = vadd.f32 0.0, %v440
        %v442 = vpop.f32.mrf.mxu0
        %443 = vdwg.mxu0
        %vm444 = vcmask 130048
        %v446 = vsel %vm444, %v282, 0
        %v449 = vsel %vm444, %v283, 0
        %451 = vmatprep.subr.mxu0 0.0
        %452 = vmatpush1.msra.mxu0 0.0
        %453 = vmatprep.subr.mxu0 0.0
        %454 = vmatpush1.msra.mxu0 0.0
        %455 = vmatprep.subr.mxu0 0.0
        %456 = vmatpush1.msra.mxu0 0.0
        %457 = vmatprep.subr.mxu0 0.0
        %458 = vmatpush1.msra.mxu0 0.0
        %459 = vmatprep.subr.mxu0 0.0
        %460 = vmatpush1.msra.mxu0 0.0
        %461 = vmatprep.subr.mxu0 0.0
        %462 = vmatpush1.msra.mxu0 0.0
        %463 = vmatprep.subr.mxu0 0.0
        %464 = vmatpush1.msra.mxu0 0.0
        %465 = vmatprep.subr.mxu0 0.0
        %466 = vmatpush1.msra.mxu0 0.0
        %467 = vmatprep.subr.mxu0 0.0
        %468 = vmatpush1.msra.mxu0 0.0
        %469 = vmatprep.subr.mxu0 0.0
        %470 = vmatpush1.msra.mxu0 0.0
        %471 = vmatprep.subr.mxu0 0.0
        %472 = vmatpush1.msra.mxu0 0.0
        %473 = vmatprep.subr.mxu0 0.0
        %474 = vmatpush1.msra.mxu0 0.0
        %475 = vmatprep.subr.mxu0 0.0
        %476 = vmatpush1.msra.mxu0 0.0
        %477 = vmatprep.subr.mxu0 0.0
        %478 = vmatpush1.msra.mxu0 0.0
        %479 = vmatprep.subr.mxu0 0.0
        %480 = vmatpush1.msra.mxu0 %v401
        %481 = vmatprep.subr.mxu0 0.0
        %482 = vmatpush1.msra.mxu0 %v396
        %483 = vmatprep.subr.mxu0 0.0
        %484 = vmatpush2.msra.mxu0 0.0
        %485 = vmatprep.subr.mxu0 0.0
        %486 = vmatpush2.msra.mxu0 0.0
        %487 = vmatprep.subr.mxu0 0.0
        %488 = vmatpush2.msra.mxu0 0.0
        %489 = vmatprep.subr.mxu0 0.0
        %490 = vmatpush2.msra.mxu0 0.0
        %491 = vmatprep.subr.mxu0 0.0
        %492 = vmatpush2.msra.mxu0 0.0
        %493 = vmatprep.subr.mxu0 0.0
        %494 = vmatpush2.msra.mxu0 0.0
        %495 = vmatprep.subr.mxu0 0.0
        %496 = vmatpush2.msra.mxu0 0.0
        %497 = vmatprep.subr.mxu0 0.0
        %498 = vmatpush2.msra.mxu0 0.0
        %499 = vmatprep.subr.mxu0 0.0
        %500 = vmatpush2.msra.mxu0 0.0
        %501 = vmatprep.subr.mxu0 0.0
        %502 = vmatpush2.msra.mxu0 0.0
        %503 = vmatprep.subr.mxu0 0.0
        %504 = vmatpush2.msra.mxu0 0.0
        %505 = vmatprep.subr.mxu0 0.0
        %506 = vmatpush2.msra.mxu0 0.0
        %507 = vmatprep.subr.mxu0 0.0
        %508 = vmatpush2.msra.mxu0 0.0
        %509 = vmatprep.subr.mxu0 0.0
        %510 = vmatpush2.msra.mxu0 0.0
        %511 = vmatprep.subr.mxu0 0.0
        %512 = vmatpush2.msra.mxu0 0.0
        %513 = vmatprep.subr.mxu0 0.0
        %514 = vmatpush2.msra.mxu0 0.0
        %515 = vmatprep.mubr.f32.mxu0 0.0
        %516 = vmatmul.mubr.f32.gmra.mxu0 %v446
        %v517 = vpop.f32.mrf.mxu0
        %v518 = vadd.f32 0.0, %v517
        %v519 = vpop.f32.mrf.mxu0
        %520 = vmatprep.mubr.f32.mxu0 0.0
        %521 = vmatmul.mubr.f32.gmra.mxu0 %v449
        %v522 = vpop.f32.mrf.mxu0
        %v523 = vadd.f32 0.0, %v522
        %v524 = vpop.f32.mrf.mxu0
        %525 = vdwg.mxu0
        %526 = vmatprep.subr.mxu0 0.0
        %527 = vmatpush1.msra.mxu0 0.0
        %528 = vmatprep.subr.mxu0 0.0
        %529 = vmatpush1.msra.mxu0 0.0
        %530 = vmatprep.subr.mxu0 0.0
        %531 = vmatpush1.msra.mxu0 0.0
        %532 = vmatprep.subr.mxu0 0.0
        %533 = vmatpush1.msra.mxu0 0.0
        %534 = vmatprep.subr.mxu0 0.0
        %535 = vmatpush1.msra.mxu0 0.0
        %536 = vmatprep.subr.mxu0 0.0
        %537 = vmatpush1.msra.mxu0 0.0
        %538 = vmatprep.subr.mxu0 0.0
        %539 = vmatpush1.msra.mxu0 0.0
        %540 = vmatprep.subr.mxu0 0.0
        %541 = vmatpush1.msra.mxu0 0.0
        %542 = vmatprep.subr.mxu0 0.0
        %543 = vmatpush1.msra.mxu0 0.0
        %544 = vmatprep.subr.mxu0 0.0
        %545 = vmatpush1.msra.mxu0 0.0
        %546 = vmatprep.subr.mxu0 0.0
        %547 = vmatpush1.msra.mxu0 0.0
        %548 = vmatprep.subr.mxu0 0.0
        %549 = vmatpush1.msra.mxu0 0.0
        %550 = vmatprep.subr.mxu0 0.0
        %551 = vmatpush1.msra.mxu0 0.0
        %552 = vmatprep.subr.mxu0 0.0
        %553 = vmatpush1.msra.mxu0 0.0
        %554 = vmatprep.subr.mxu0 0.0
        %555 = vmatpush1.msra.mxu0 %v411
        %556 = vmatprep.subr.mxu0 0.0
        %557 = vmatpush1.msra.mxu0 %v406
        %558 = vmatprep.subr.mxu0 0.0
        %559 = vmatpush2.msra.mxu0 0.0
        %560 = vmatprep.subr.mxu0 0.0
        %561 = vmatpush2.msra.mxu0 0.0
        %562 = vmatprep.subr.mxu0 0.0
        %563 = vmatpush2.msra.mxu0 0.0
        %564 = vmatprep.subr.mxu0 0.0
        %565 = vmatpush2.msra.mxu0 0.0
        %566 = vmatprep.subr.mxu0 0.0
        %567 = vmatpush2.msra.mxu0 0.0
        %568 = vmatprep.subr.mxu0 0.0
        %569 = vmatpush2.msra.mxu0 0.0
        %570 = vmatprep.subr.mxu0 0.0
        %571 = vmatpush2.msra.mxu0 0.0
        %572 = vmatprep.subr.mxu0 0.0
        %573 = vmatpush2.msra.mxu0 0.0
        %574 = vmatprep.subr.mxu0 0.0
        %575 = vmatpush2.msra.mxu0 0.0
        %576 = vmatprep.subr.mxu0 0.0
        %577 = vmatpush2.msra.mxu0 0.0
        %578 = vmatprep.subr.mxu0 0.0
        %579 = vmatpush2.msra.mxu0 0.0
        %580 = vmatprep.subr.mxu0 0.0
        %581 = vmatpush2.msra.mxu0 0.0
        %582 = vmatprep.subr.mxu0 0.0
        %583 = vmatpush2.msra.mxu0 0.0
        %584 = vmatprep.subr.mxu0 0.0
        %585 = vmatpush2.msra.mxu0 0.0
        %586 = vmatprep.subr.mxu0 0.0
        %587 = vmatpush2.msra.mxu0 0.0
        %588 = vmatprep.subr.mxu0 0.0
        %589 = vmatpush2.msra.mxu0 0.0
        %590 = vmatprep.mubr.f32.mxu0 0.0
        %591 = vmatmul.mubr.f32.gmra.mxu0 %v446
        %v592 = vpop.f32.mrf.mxu0
        %v593 = vadd.f32 0.0, %v592
        %v594 = vpop.f32.mrf.mxu0
        %595 = vmatprep.mubr.f32.mxu0 0.0
        %596 = vmatmul.mubr.f32.gmra.mxu0 %v449
        %v597 = vpop.f32.mrf.mxu0
        %v598 = vadd.f32 0.0, %v597
        %v599 = vpop.f32.mrf.mxu0
        %600 = vdwg.mxu0
        %601 = vmatprep.subr.mxu0 0.0
        %602 = vmatpush1.msra.mxu0 0.0
        %603 = vmatprep.subr.mxu0 0.0
        %604 = vmatpush1.msra.mxu0 0.0
        %605 = vmatprep.subr.mxu0 0.0
        %606 = vmatpush1.msra.mxu0 0.0
        %607 = vmatprep.subr.mxu0 0.0
        %608 = vmatpush1.msra.mxu0 0.0
        %609 = vmatprep.subr.mxu0 0.0
        %610 = vmatpush1.msra.mxu0 0.0
        %611 = vmatprep.subr.mxu0 0.0
        %612 = vmatpush1.msra.mxu0 0.0
        %613 = vmatprep.subr.mxu0 0.0
        %614 = vmatpush1.msra.mxu0 0.0
        %615 = vmatprep.subr.mxu0 0.0
        %616 = vmatpush1.msra.mxu0 0.0
        %617 = vmatprep.subr.mxu0 0.0
        %618 = vmatpush1.msra.mxu0 0.0
        %619 = vmatprep.subr.mxu0 0.0
        %620 = vmatpush1.msra.mxu0 0.0
        %621 = vmatprep.subr.mxu0 0.0
        %622 = vmatpush1.msra.mxu0 0.0
        %623 = vmatprep.subr.mxu0 0.0
        %624 = vmatpush1.msra.mxu0 0.0
        %625 = vmatprep.subr.mxu0 0.0
        %626 = vmatpush1.msra.mxu0 0.0
        %627 = vmatprep.subr.mxu0 0.0
        %628 = vmatpush1.msra.mxu0 0.0
        %629 = vmatprep.subr.mxu0 0.0
        %630 = vmatpush1.msra.mxu0 %v421
        %631 = vmatprep.subr.mxu0 0.0
        %632 = vmatpush1.msra.mxu0 %v416
        %633 = vmatprep.subr.mxu0 0.0
        %634 = vmatpush2.msra.mxu0 0.0
        %635 = vmatprep.subr.mxu0 0.0
        %636 = vmatpush2.msra.mxu0 0.0
        %637 = vmatprep.subr.mxu0 0.0
        %638 = vmatpush2.msra.mxu0 0.0
        %639 = vmatprep.subr.mxu0 0.0
        %640 = vmatpush2.msra.mxu0 0.0
        %641 = vmatprep.subr.mxu0 0.0
        %642 = vmatpush2.msra.mxu0 0.0
        %643 = vmatprep.subr.mxu0 0.0
        %644 = vmatpush2.msra.mxu0 0.0
        %645 = vmatprep.subr.mxu0 0.0
        %646 = vmatpush2.msra.mxu0 0.0
        %647 = vmatprep.subr.mxu0 0.0
        %648 = vmatpush2.msra.mxu0 0.0
        %649 = vmatprep.subr.mxu0 0.0
        %650 = vmatpush2.msra.mxu0 0.0
        %651 = vmatprep.subr.mxu0 0.0
        %652 = vmatpush2.msra.mxu0 0.0
        %653 = vmatprep.subr.mxu0 0.0
        %654 = vmatpush2.msra.mxu0 0.0
        %655 = vmatprep.subr.mxu0 0.0
        %656 = vmatpush2.msra.mxu0 0.0
        %657 = vmatprep.subr.mxu0 0.0
        %658 = vmatpush2.msra.mxu0 0.0
        %659 = vmatprep.subr.mxu0 0.0
        %660 = vmatpush2.msra.mxu0 0.0
        %661 = vmatprep.subr.mxu0 0.0
        %662 = vmatpush2.msra.mxu0 0.0
        %663 = vmatprep.subr.mxu0 0.0
        %664 = vmatpush2.msra.mxu0 0.0
        %665 = vmatprep.mubr.f32.mxu0 0.0
        %666 = vmatmul.mubr.f32.gmra.mxu0 %v446
        %v667 = vpop.f32.mrf.mxu0
        %v668 = vadd.f32 0.0, %v667
        %v669 = vpop.f32.mrf.mxu0
        %670 = vmatprep.mubr.f32.mxu0 0.0
        %671 = vmatmul.mubr.f32.gmra.mxu0 %v449
        %v672 = vpop.f32.mrf.mxu0
        %v673 = vadd.f32 0.0, %v672
        %v674 = vpop.f32.mrf.mxu0
        %675 = vdwg.mxu0
        %v676 = vmul.f32 %v518, %v518
        %v677 = vmul.f32 %v523, %v523
        %v678 = vsub.f32 %v668, %v676
        %v679 = vsub.f32 %v673, %v677
        %680 = vmatprep.subr.mxu0 0.0
        %681 = vmatpush1.msra.mxu0 0.0
        %682 = vmatprep.subr.mxu0 0.0
        %683 = vmatpush1.msra.mxu0 0.0
        %684 = vmatprep.subr.mxu0 0.0
        %685 = vmatpush1.msra.mxu0 0.0
        %686 = vmatprep.subr.mxu0 0.0
        %687 = vmatpush1.msra.mxu0 0.0
        %688 = vmatprep.subr.mxu0 0.0
        %689 = vmatpush1.msra.mxu0 0.0
        %690 = vmatprep.subr.mxu0 0.0
        %691 = vmatpush1.msra.mxu0 0.0
        %692 = vmatprep.subr.mxu0 0.0
        %693 = vmatpush1.msra.mxu0 0.0
        %694 = vmatprep.subr.mxu0 0.0
        %695 = vmatpush1.msra.mxu0 0.0
        %696 = vmatprep.subr.mxu0 0.0
        %697 = vmatpush1.msra.mxu0 0.0
        %698 = vmatprep.subr.mxu0 0.0
        %699 = vmatpush1.msra.mxu0 0.0
        %700 = vmatprep.subr.mxu0 0.0
        %701 = vmatpush1.msra.mxu0 0.0
        %702 = vmatprep.subr.mxu0 0.0
        %703 = vmatpush1.msra.mxu0 0.0
        %704 = vmatprep.subr.mxu0 0.0
        %705 = vmatpush1.msra.mxu0 0.0
        %706 = vmatprep.subr.mxu0 0.0
        %707 = vmatpush1.msra.mxu0 0.0
        %708 = vmatprep.subr.mxu0 0.0
        %709 = vmatpush1.msra.mxu0 %v431
        %710 = vmatprep.subr.mxu0 0.0
        %711 = vmatpush1.msra.mxu0 %v426
        %712 = vmatprep.subr.mxu0 0.0
        %713 = vmatpush2.msra.mxu0 0.0
        %714 = vmatprep.subr.mxu0 0.0
        %715 = vmatpush2.msra.mxu0 0.0
        %716 = vmatprep.subr.mxu0 0.0
        %717 = vmatpush2.msra.mxu0 0.0
        %718 = vmatprep.subr.mxu0 0.0
        %719 = vmatpush2.msra.mxu0 0.0
        %720 = vmatprep.subr.mxu0 0.0
        %721 = vmatpush2.msra.mxu0 0.0
        %722 = vmatprep.subr.mxu0 0.0
        %723 = vmatpush2.msra.mxu0 0.0
        %724 = vmatprep.subr.mxu0 0.0
        %725 = vmatpush2.msra.mxu0 0.0
        %726 = vmatprep.subr.mxu0 0.0
        %727 = vmatpush2.msra.mxu0 0.0
        %728 = vmatprep.subr.mxu0 0.0
        %729 = vmatpush2.msra.mxu0 0.0
        %730 = vmatprep.subr.mxu0 0.0
        %731 = vmatpush2.msra.mxu0 0.0
        %732 = vmatprep.subr.mxu0 0.0
        %733 = vmatpush2.msra.mxu0 0.0
        %734 = vmatprep.subr.mxu0 0.0
        %735 = vmatpush2.msra.mxu0 0.0
        %736 = vmatprep.subr.mxu0 0.0
        %737 = vmatpush2.msra.mxu0 0.0
        %738 = vmatprep.subr.mxu0 0.0
        %739 = vmatpush2.msra.mxu0 0.0
        %740 = vmatprep.subr.mxu0 0.0
        %741 = vmatpush2.msra.mxu0 0.0
        %742 = vmatprep.subr.mxu0 0.0
        %743 = vmatpush2.msra.mxu0 0.0
        %744 = vmatprep.mubr.f32.mxu0 0.0
        %745 = vmatmul.mubr.f32.gmra.mxu0 %v446
        %v746 = vpop.f32.mrf.mxu0
        %v747 = vadd.f32 0.0, %v746
        %v748 = vpop.f32.mrf.mxu0
        %749 = vmatprep.mubr.f32.mxu0 0.0
        %750 = vmatmul.mubr.f32.gmra.mxu0 %v449
        %v751 = vpop.f32.mrf.mxu0
        %v752 = vadd.f32 0.0, %v751
        %v753 = vpop.f32.mrf.mxu0
        %754 = vdwg.mxu0
        %v755 = vmul.f32 %v593, %v593
        %v756 = vmul.f32 %v598, %v598
        %v757 = vsub.f32 %v747, %v755
        %v758 = vsub.f32 %v752, %v756
        %759 = vmatprep.subr.mxu0 0.0
        %760 = vmatpush1.msra.mxu0 0.0
        %761 = vmatprep.subr.mxu0 0.0
        %762 = vmatpush1.msra.mxu0 0.0
        %763 = vmatprep.subr.mxu0 0.0
        %764 = vmatpush1.msra.mxu0 0.0
        %765 = vmatprep.subr.mxu0 0.0
        %766 = vmatpush1.msra.mxu0 0.0
        %767 = vmatprep.subr.mxu0 0.0
        %768 = vmatpush1.msra.mxu0 0.0
        %769 = vmatprep.subr.mxu0 0.0
        %770 = vmatpush1.msra.mxu0 0.0
        %771 = vmatprep.subr.mxu0 0.0
        %772 = vmatpush1.msra.mxu0 0.0
        %773 = vmatprep.subr.mxu0 0.0
        %774 = vmatpush1.msra.mxu0 0.0
        %775 = vmatprep.subr.mxu0 0.0
        %776 = vmatpush1.msra.mxu0 0.0
        %777 = vmatprep.subr.mxu0 0.0
        %778 = vmatpush1.msra.mxu0 0.0
        %779 = vmatprep.subr.mxu0 0.0
        %780 = vmatpush1.msra.mxu0 0.0
        %781 = vmatprep.subr.mxu0 0.0
        %782 = vmatpush1.msra.mxu0 0.0
        %783 = vmatprep.subr.mxu0 0.0
        %784 = vmatpush1.msra.mxu0 0.0
        %785 = vmatprep.subr.mxu0 0.0
        %786 = vmatpush1.msra.mxu0 0.0
        %787 = vmatprep.subr.mxu0 0.0
        %788 = vmatpush1.msra.mxu0 %v441
        %789 = vmatprep.subr.mxu0 0.0
        %790 = vmatpush1.msra.mxu0 %v436
        %791 = vmatprep.subr.mxu0 0.0
        %792 = vmatpush2.msra.mxu0 0.0
        %793 = vmatprep.subr.mxu0 0.0
        %794 = vmatpush2.msra.mxu0 0.0
        %795 = vmatprep.subr.mxu0 0.0
        %796 = vmatpush2.msra.mxu0 0.0
        %797 = vmatprep.subr.mxu0 0.0
        %798 = vmatpush2.msra.mxu0 0.0
        %799 = vmatprep.subr.mxu0 0.0
        %800 = vmatpush2.msra.mxu0 0.0
        %801 = vmatprep.subr.mxu0 0.0
        %802 = vmatpush2.msra.mxu0 0.0
        %803 = vmatprep.subr.mxu0 0.0
        %804 = vmatpush2.msra.mxu0 0.0
        %805 = vmatprep.subr.mxu0 0.0
        %806 = vmatpush2.msra.mxu0 0.0
        %807 = vmatprep.subr.mxu0 0.0
        %808 = vmatpush2.msra.mxu0 0.0
        %809 = vmatprep.subr.mxu0 0.0
        %810 = vmatpush2.msra.mxu0 0.0
        %811 = vmatprep.subr.mxu0 0.0
        %812 = vmatpush2.msra.mxu0 0.0
        %813 = vmatprep.subr.mxu0 0.0
        %814 = vmatpush2.msra.mxu0 0.0
        %815 = vmatprep.subr.mxu0 0.0
        %816 = vmatpush2.msra.mxu0 0.0
        %817 = vmatprep.subr.mxu0 0.0
        %818 = vmatpush2.msra.mxu0 0.0
        %819 = vmatprep.subr.mxu0 0.0
        %820 = vmatpush2.msra.mxu0 0.0
        %821 = vmatprep.subr.mxu0 0.0
        %822 = vmatpush2.msra.mxu0 0.0
        %823 = vmatprep.mubr.f32.mxu0 0.0
        %824 = vmatmul.mubr.f32.gmra.mxu0 %v446
        %v825 = vpop.f32.mrf.mxu0
        %v826 = vadd.f32 0.0, %v825
        %v827 = vpop.f32.mrf.mxu0
        %828 = vmatprep.mubr.f32.mxu0 0.0
        %829 = vmatmul.mubr.f32.gmra.mxu0 %v449
        %v830 = vpop.f32.mrf.mxu0
        %v831 = vadd.f32 0.0, %v830
        %v832 = vpop.f32.mrf.mxu0
        %833 = vdwg.mxu0
        %v834 = vmul.f32 %v518, %v593
        %v835 = vmul.f32 %v523, %v598
        %v836 = vsub.f32 %v826, %v834
        %v837 = vsub.f32 %v831, %v835
        %v838 = vmul.f32 %v518, 2.0
        %v839 = vmul.f32 %v523, 2.0
        %v840 = vmul.f32 %v838, %v593
        %v841 = vmul.f32 %v839, %v598
        %v842 = vadd.f32 %v840, 0.0001
        %v843 = vadd.f32 %v841, 0.0001
        %v844 = vmul.f32 %v836, 2.0
        %v845 = vmul.f32 %v837, 2.0
        %v846 = vadd.f32 %v844, 0.0009
        %v847 = vadd.f32 %v845, 0.0009
        %v848 = vmul.f32 %v842, %v846
        %v849 = vmul.f32 %v843, %v847
        %v850 = vadd.f32 %v676, %v755
        %v851 = vadd.f32 %v677, %v756
        %v852 = vadd.f32 %v850, 0.0001
        %v853 = vadd.f32 %v851, 0.0001
        %v854 = vadd.f32 %v678, %v757
        %v855 = vadd.f32 %v679, %v758
        %v856 = vadd.f32 %v854, 0.0009
        %v857 = vadd.f32 %v855, 0.0009
        %v858 = vmul.f32 %v852, %v856
        %v859 = vmul.f32 %v853, %v857
        %v860 = vrcp.pop %v858
        %v861 = vmul.f32 %v848, %v860
        %v862 = vrcp.pop %v859
        %v863 = vmul.f32 %v849, %v862
        %v864 = vsub.f32 %v278, %v280
        %v865 = vsub.f32 %v279, %v281
        %v866 = vand.u32 2147483647, %v864
        %v867 = vand.u32 2147483647, %v865
        %v868 = vsel %vm298, %v866, 0.0
        %v869 = vsel %vm298, %v867, 0.0
        %v870 = vadd.f32 %v868, %v869
        %871 = vadd.xlane.f32.xlu0 %v870
        %v872 = vpop.xlane.xlu0 %871
        %v873 = vrot.slane %v872, 4
        %v874 = vadd.f32 %v872, %v873
        %v875 = vrot.slane %v874, 2
        %v876 = vadd.f32 %v874, %v875
        %v877 = vrot.slane %v876, 1
        %v878 = vadd.f32 %v876, %v877
        %s879 = vtos %v878
        %v880 = vsub.f32 1.0, %v861
        %v881 = vsub.f32 1.0, %v863
        %v882 = vsel %vm298, %v880, 0.0
        %v883 = vsel %vm298, %v881, 0.0
        %v884 = vadd.f32 %v882, %v883
        %885 = vadd.xlane.f32.xlu0 %v884
        %v886 = vpop.xlane.xlu0 %885
        %v887 = vrot.slane %v886, 4
        %v888 = vadd.f32 %v886, %v887
        %v889 = vrot.slane %v888, 2
        %v890 = vadd.f32 %v888, %v889
        %v891 = vrot.slane %v890, 1
        %v892 = vadd.f32 %v890, %v891
        %s893 = vtos %v892
        %s894 = smul.f32 %s879, 0.8
        %s895 = smul.f32 %s893, 0.2
        %s896 = sadd.f32 %s894, %s895
        %v897 = vstv %s896
        %vm898 = vcmask 0
        %899 = vst.msk [vmem:[%s277] sm:$0x1] %vm898, %v897
        %p900 = scmp.lt.s32.totalorder %s17, 1
        %s901 = scalar_select %p900, %s17, 1
        %s902 = scalar_lea.vmem %s4, %s901
        // Predicated region
        $region53: #{tpu_custom_call.1} parent=35 // pred_check
          %p903 = pneg %p129
        $region54: #{tpu_custom_call.1} parent=35 // pred_check_branch
          %905 = sbr.rel (%p903) target = $region56
        $region55: #{tpu_custom_call.1} parent=35 // pred_region
          _
        $region56: #{tpu_custom_call.1} parent=35 // pred_fallthru
          _
      $region36: #{tpu_custom_call.1} parent=5 // pred_fallthru
        _
      %p906 = scmp.le.s32.totalorder 2, %s12
      // Predicated region
      $region57: #{tpu_custom_call.1} parent=5 // pred_check
        %p907 = pneg %p906
      $region58: #{tpu_custom_call.1} parent=5 // pred_check_branch
        %909 = sbr.rel (%p907) target = $region60
      $region59: #{tpu_custom_call.1} parent=5 // pred_region
        %s910 = ssub.s32 %s12, 2
        // Predicated region
        $region61: #{tpu_custom_call.1} parent=59 // pred_check
          %p911 = pneg %p135
        $region62: #{tpu_custom_call.1} parent=59 // pred_check_branch
          %913 = sbr.rel (%p911) target = $region64
        $region63: #{tpu_custom_call.1} parent=59 // pred_region
          %p914 = scmp.lt.s32.totalorder %s18, 1
          %s915 = scalar_select %p914, %s18, 1
          %s916 = scalar_lea.vmem %s4, %s915
        $region64: #{tpu_custom_call.1} parent=59 // pred_fallthru
          _
      $region60: #{tpu_custom_call.1} parent=5 // pred_fallthru
        _
    $region6: #{tpu_custom_call.1} parent=1 // loop_footer
      %s16 = sadd.s32 1, %s12
    $region7: #{tpu_custom_call.1} parent=1 // loop_footer_branch
      %11 = sbr.rel target = $region3
    $region8: #{tpu_custom_call.1} parent=1 // loop_exit
      _
    %917 = vsyncpa [#allocation3], 1
    %s918 = scalar_lea.sflag [#allocation3], 1
    %919 = vsyncpa %s918, 1
    %920 = vsyncpa [#allocation5], 1

</llo_original>
